<compile_context>
chip_gen: v7x
topology: tpu7x:2x2x1
jax: 0.10.0
libtpu: 0.0.40
codegen_flags: <defaults>
</compile_context>

<pallas_src>
import functools

import jax
import jax.numpy as jnp
from jax import lax
from jax.experimental import pallas as pl
from jax.experimental.pallas import tpu as pltpu

_LANES = 128             # points per packed row
_ROW_ELEMS = 3 * _LANES  # 384 interleaved floats per packed row


def _cdiv(a, b):
    return -(-a // b)


def _round_up(a, b):
    return _cdiv(a, b) * b


def _homogeneity_kernel(x_ref, omax_ref, omin_ref, osum_ref,
                        p_sc, amax, amin, asum,
                        *, n_rows, block_rows, acc_rows, nstripes, maybe_partial):
    s = pl.program_id(0)
    nsteps = pl.num_programs(0)

    # ---- one-time init: selector matrix + running stats ---------------------
    @pl.when(s == 0)
    def _init():
        # 0/1 de-interleave matrix: column j sums lanes 3j, 3j+1, 3j+2.
        r = lax.broadcasted_iota(jnp.int32, p_sc.shape, 0)
        c3 = 3 * lax.broadcasted_iota(jnp.int32, p_sc.shape, 1)
        sel = jnp.logical_and(r >= c3, r < c3 + 3)
        p_sc[...] = jnp.where(sel, 1.0, 0.0).astype(p_sc.dtype)
        amax[...] = jnp.full(amax.shape, -jnp.inf, amax.dtype)
        amin[...] = jnp.full(amin.shape, jnp.inf, amin.dtype)
        asum[...] = jnp.zeros(asum.shape, asum.dtype)

    p = p_sc[...]  # (384, 128) bf16, resident in VMEM scratch

    def stripe_strengths(t):
        # t is a static python int -> static sublane slice of the block.
        x = x_ref[pl.ds(t * acc_rows, acc_rows), :]   # (acc_rows, 384) f32
        sq = x * x
        # Exact hi+lo bf16 split: the bf16 MXU de-interleave (0/1 weights, f32
        # accumulation) stays ~f32 accurate (~1e-5 relative).
        sq_hi = sq.astype(jnp.bfloat16)
        sq_lo = (sq - sq_hi.astype(jnp.float32)).astype(jnp.bfloat16)
        s2 = jnp.dot(sq_hi, p, preferred_element_type=jnp.float32)
        s2 = s2 + jnp.dot(sq_lo, p, preferred_element_type=jnp.float32)
        return jnp.sqrt(s2)                            # (acc_rows, 128)

    def accumulate(masked):
        # Fold this block into fixed-height accumulators, stripe by stripe.
        for t in range(nstripes):
            strengths = stripe_strengths(t)
            if masked:
                # Row-level validity (n is a multiple of 128 inside the
                # kernel, so whole rows are either valid or padding).
                base_row = s * block_rows + t * acc_rows
                row_id = lax.broadcasted_iota(jnp.int32, strengths.shape, 0)
                valid = (base_row + row_id) < n_rows
                str_max = jnp.where(valid, strengths, -jnp.inf)
                str_min = jnp.where(valid, strengths, jnp.inf)
                str_sum = jnp.where(valid, strengths, 0.0)
            else:
                str_max = str_min = str_sum = strengths
            amax[...] = jnp.maximum(amax[...], str_max)
            amin[...] = jnp.minimum(amin[...], str_min)
            asum[...] = asum[...] + str_sum

    if maybe_partial:
        # Only the single overhanging final block pays for the mask.
        @pl.when(s < nsteps - 1)
        def _full_blocks():
            accumulate(False)

        @pl.when(s == nsteps - 1)
        def _tail_block():
            accumulate(True)
    else:
        accumulate(False)

    # ---- single cross-sublane reduce + writeback on the last step -----------
    @pl.when(s == nsteps - 1)
    def _finalize():
        omax_ref[...] = jnp.broadcast_to(
            jnp.max(amax[...], axis=0, keepdims=True), omax_ref.shape)
        omin_ref[...] = jnp.broadcast_to(
            jnp.min(amin[...], axis=0, keepdims=True), omin_ref.shape)
        osum_ref[...] = jnp.broadcast_to(
            jnp.sum(asum[...], axis=0, keepdims=True), osum_ref.shape)


def _homogeneity_jnp(X, multiplier):
    strengths = jnp.sqrt(jnp.sum(X * X, axis=1))
    return multiplier * (strengths.max() - strengths.min()) / (strengths.mean() + 1e-12)


def homogeneity(X, multiplier=1000000.0, *, max_block_rows=4096,
                acc_rows_cap=512, min_kernel_points=65536):
    """Pallas TPU equivalent of Homogeneity.forward(X, multiplier).

    X: (n, 3) array of sampled field points.  Returns the scalar W.
      max_block_rows: rows (of 128 points) streamed per grid step (default
        4096 rows = 512K points = 6 MiB f32 -> 12 MiB double-buffered).
      acc_rows_cap: height of the fixed f32 max/min/sum accumulators.
      min_kernel_points: below this, compute with plain jnp (fast path).
    """
    X = jnp.asarray(X, jnp.float32)
    if X.ndim != 2 or X.shape[1] != 3:
        raise ValueError(f"expected (n, 3) input, got {X.shape}")
    n = int(X.shape[0])
    multiplier = jnp.float32(multiplier)

    n_main = (n // _LANES) * _LANES
    if n < int(min_kernel_points) or n_main == 0:
        # Small inputs: kernel launch + output roundtrip would dominate.
        return _homogeneity_jnp(X, multiplier)

    rows = n_main // _LANES
    acc_cap = max(8, (int(acc_rows_cap) // 8) * 8)
    block_rows = min(int(max_block_rows), _round_up(rows, 8))
    block_rows = max(8, _round_up(block_rows, 8))
    if block_rows >= acc_cap:
        acc_rows = acc_cap
        block_rows = _round_up(block_rows, acc_rows)
    else:
        acc_rows = block_rows
    nstripes = block_rows // acc_rows
    steps = _cdiv(rows, block_rows)
    maybe_partial = (rows % block_rows) != 0

    # Free row-major reshape: each row packs 128 consecutive points with their
    # (x, y, z) components interleaved.  No transpose, no padding pass.
    if n_main == n:
        x2d = X.reshape(rows, _ROW_ELEMS)
    else:
        # TODO(synk): the prefix slice for unaligned n may still materialize a
        # copy in XLA; feed n as a multiple of 128 for the guaranteed
        # zero-copy path.  The <128-point ragged tail is handled below in jnp.
        x2d = X[:n_main].reshape(rows, _ROW_ELEMS)

    kernel = functools.partial(
        _homogeneity_kernel, n_rows=rows, block_rows=block_rows,
        acc_rows=acc_rows, nstripes=nstripes, maybe_partial=maybe_partial)

    out_stat = jax.ShapeDtypeStruct((8, _LANES), jnp.float32)
    pmax, pmin, psum = pl.pallas_call(
        kernel,
        out_shape=(out_stat, out_stat, out_stat),
        grid_spec=pltpu.PrefetchScalarGridSpec(
            num_scalar_prefetch=0,
            grid=(steps,),
            in_specs=[
                pl.BlockSpec((block_rows, _ROW_ELEMS), lambda s: (s, 0)),
            ],
            out_specs=[
                pl.BlockSpec((8, _LANES), lambda s: (0, 0)),
                pl.BlockSpec((8, _LANES), lambda s: (0, 0)),
                pl.BlockSpec((8, _LANES), lambda s: (0, 0)),
            ],
            scratch_shapes=[
                pltpu.VMEM((_ROW_ELEMS, _LANES), jnp.bfloat16),   # selector P
                pltpu.VMEM((acc_rows, _LANES), jnp.float32),      # running max
                pltpu.VMEM((acc_rows, _LANES), jnp.float32),      # running min
                pltpu.VMEM((acc_rows, _LANES), jnp.float32),      # running sum
            ],
        ),
        compiler_params=pltpu.CompilerParams(
            # TODO(synk): use pltpu.CORE_PARALLEL / pl.core_map to shard this
            # axis across v7x's two TensorCores.
            dimension_semantics=("arbitrary",),
            vmem_limit_bytes=32 * 1024 * 1024,
        ),
        cost_estimate=pl.CostEstimate(
            flops=20 * n_main, transcendentals=n_main, bytes_accessed=12 * n_main),
    )(x2d)

    s_max = jnp.max(pmax)
    s_min = jnp.min(pmin)
    s_sum = jnp.sum(psum[0, :])

    if n_main != n:
        # Ragged (<128-point) tail: plain jnp, folded into the partials.
        tail = X[n_main:]
        tail_str = jnp.sqrt(jnp.sum(tail * tail, axis=1))
        s_max = jnp.maximum(s_max, jnp.max(tail_str))
        s_min = jnp.minimum(s_min, jnp.min(tail_str))
        s_sum = s_sum + jnp.sum(tail_str)

    s_mean = s_sum / jnp.float32(n)
    return multiplier * (s_max - s_min) / (s_mean + 1e-12)


def _homogeneity_ref(X, multiplier=1000000.0):
    X = jnp.asarray(X, jnp.float32)
    strengths = jnp.sqrt(jnp.sum(X ** 2, axis=1))
    return multiplier * (strengths.max() - strengths.min()) / (strengths.mean() + 1e-12)


if __name__ == "__main__":
    key = jax.random.PRNGKey(0)
    k0, k1, k2, k3 = jax.random.split(key, 4)

    # 1) Small (n, 3) input, Pallas path forced (single partial block, masked).
    n = 256
    X = jax.random.normal(k0, (n, 3), dtype=jnp.float32)
    w = jax.block_until_ready(homogeneity(X, min_kernel_points=0))
    w_ref = jax.block_until_ready(_homogeneity_ref(X))
    assert jnp.allclose(w, w_ref, rtol=2e-4, atol=1e-2), (w, w_ref)

    # 2) Unaligned n: multi-step streaming + masked final block + ragged tail.
    n2 = 5000
    X2 = jax.random.normal(k1, (n2, 3), dtype=jnp.float32) + 2.0
    w2 = jax.block_until_ready(homogeneity(X2, max_block_rows=8, min_kernel_points=0))
    w2_ref = jax.block_until_ready(_homogeneity_ref(X2))
    assert jnp.allclose(w2, w2_ref, rtol=2e-4, atol=1e-2), (w2, w2_ref)

    # 3) Exercise the multi-stripe accumulate path (nstripes > 1).
    n2b = 5120
    X2b = jax.random.normal(k3, (n2b, 3), dtype=jnp.float32)
    w2b = jax.block_until_ready(
        homogeneity(X2b, max_block_rows=32, acc_rows_cap=16, min_kernel_points=0))
    w2b_ref = jax.block_until_ready(_homogeneity_ref(X2b))
    assert jnp.allclose(w2b, w2b_ref, rtol=2e-4, atol=1e-2), (w2b, w2b_ref)

    # 4) Exactly 128-aligned n: zero-copy reshape, fully unmasked path.
    n3 = 2048
    X3 = jax.random.normal(k2, (n3, 3), dtype=jnp.float32)
    w3 = jax.block_until_ready(homogeneity(X3, min_kernel_points=0))
    w3_ref = jax.block_until_ready(_homogeneity_ref(X3))
    assert jnp.allclose(w3, w3_ref, rtol=2e-4, atol=1e-2), (w3, w3_ref)

    # 5) Default small-n fast path (pure jnp) — exact match expected.
    w_fast = jax.block_until_ready(homogeneity(X))
    assert jnp.allclose(w_fast, w_ref, rtol=1e-5, atol=1e-3), (w_fast, w_ref)

    print("KERNEL_OK")
</pallas_src>

<mosaic_0001>
module attributes {stable_mosaic.version = 11 : i64} {
  func.func @_homogeneity_kernel(%arg0: i32, %arg1: memref<8x384xf32, #tpu.memory_space<vmem>>, %arg2: memref<8x128xf32, #tpu.memory_space<vmem>>, %arg3: memref<8x128xf32, #tpu.memory_space<vmem>>, %arg4: memref<8x128xf32, #tpu.memory_space<vmem>>, %arg5: memref<384x128xbf16, #tpu.memory_space<vmem>>, %arg6: memref<8x128xf32, #tpu.memory_space<vmem>>, %arg7: memref<8x128xf32, #tpu.memory_space<vmem>>, %arg8: memref<8x128xf32, #tpu.memory_space<vmem>>) attributes {dimension_semantics = [#tpu.dimension_semantics<arbitrary>], iteration_bounds = array<i64: 1>, scalar_prefetch = 0 : i64, scratch_operands = 4 : i64, tpu.core_type = #tpu.core_type<tc>, window_params = [{transform_indices = @transform_0, window_bounds = array<i64: 8, 384>}, {pipeline_mode = #tpu.pipeline_mode<synchronous>, transform_indices = @transform_1, window_bounds = array<i64: 8, 128>}, {pipeline_mode = #tpu.pipeline_mode<synchronous>, transform_indices = @transform_2, window_bounds = array<i64: 8, 128>}, {pipeline_mode = #tpu.pipeline_mode<synchronous>, transform_indices = @transform_3, window_bounds = array<i64: 8, 128>}]} {
    %c0_i32 = arith.constant 0 : i32
    %0 = arith.cmpi eq, %arg0, %c0_i32 : i32
    %1 = arith.extui %0 : i1 to i32
    %c0_i32_0 = arith.constant 0 : i32
    %2 = arith.cmpi ne, %1, %c0_i32_0 : i32
    scf.if %2 {
      %13 = tpu.iota {dimensions = array<i32: 0>} : vector<384x128xi32>
      %14 = tpu.iota {dimensions = array<i32: 1>} : vector<384x128xi32>
      %c3_i32 = arith.constant 3 : i32
      %15 = vector.broadcast %c3_i32 : i32 to vector<384x128xi32>
      %16 = arith.muli %15, %14 : vector<384x128xi32>
      %17 = arith.cmpi sge, %13, %16 : vector<384x128xi32>
      %c3_i32_8 = arith.constant 3 : i32
      %18 = vector.broadcast %c3_i32_8 : i32 to vector<384x128xi32>
      %19 = arith.addi %16, %18 : vector<384x128xi32>
      %20 = arith.cmpi slt, %13, %19 : vector<384x128xi32>
      %21 = arith.andi %17, %20 : vector<384x128xi1>
      %cst = arith.constant 1.000000e+00 : f32
      %cst_9 = arith.constant 0.000000e+00 : f32
      %22 = vector.broadcast %cst : f32 to vector<384x128xf32>
      %23 = vector.broadcast %cst_9 : f32 to vector<384x128xf32>
      %24 = arith.select %21, %22, %23 : vector<384x128xi1>, vector<384x128xf32>
      %25 = arith.truncf %24 : vector<384x128xf32> to vector<384x128xbf16>
      %c0_10 = arith.constant 0 : index
      %c0_11 = arith.constant 0 : index
      %26 = vector.load %arg5[%c0_10, %c0_11] : memref<384x128xbf16, #tpu.memory_space<vmem>>, vector<384x128xbf16>
      tpu.vector_store %arg5[%c0_10, %c0_11], %25 {strides = array<i32>} : memref<384x128xbf16, #tpu.memory_space<vmem>>, vector<384x128xbf16>,
      %cst_12 = arith.constant 0xFF800000 : f32
      %27 = vector.broadcast %cst_12 : f32 to vector<8x128xf32>
      %c0_13 = arith.constant 0 : index
      %c0_14 = arith.constant 0 : index
      %28 = vector.load %arg6[%c0_13, %c0_14] : memref<8x128xf32, #tpu.memory_space<vmem>>, vector<8x128xf32>
      tpu.vector_store %arg6[%c0_13, %c0_14], %27 {strides = array<i32>} : memref<8x128xf32, #tpu.memory_space<vmem>>, vector<8x128xf32>,
      %cst_15 = arith.constant 0x7F800000 : f32
      %29 = vector.broadcast %cst_15 : f32 to vector<8x128xf32>
      %c0_16 = arith.constant 0 : index
      %c0_17 = arith.constant 0 : index
      %30 = vector.load %arg7[%c0_16, %c0_17] : memref<8x128xf32, #tpu.memory_space<vmem>>, vector<8x128xf32>
      tpu.vector_store %arg7[%c0_16, %c0_17], %29 {strides = array<i32>} : memref<8x128xf32, #tpu.memory_space<vmem>>, vector<8x128xf32>,
      %cst_18 = arith.constant 0.000000e+00 : f32
      %31 = vector.broadcast %cst_18 : f32 to vector<8x128xf32>
      %c0_19 = arith.constant 0 : index
      %c0_20 = arith.constant 0 : index
      %32 = vector.load %arg8[%c0_19, %c0_20] : memref<8x128xf32, #tpu.memory_space<vmem>>, vector<8x128xf32>
      tpu.vector_store %arg8[%c0_19, %c0_20], %31 {strides = array<i32>} : memref<8x128xf32, #tpu.memory_space<vmem>>, vector<8x128xf32>,
    } else {
    }
    %c0 = arith.constant 0 : index
    %c0_1 = arith.constant 0 : index
    %3 = vector.load %arg5[%c0, %c0_1] : memref<384x128xbf16, #tpu.memory_space<vmem>>, vector<384x128xbf16>
    %c0_i32_2 = arith.constant 0 : i32
    %4 = arith.cmpi slt, %arg0, %c0_i32_2 : i32
    %5 = arith.extui %4 : i1 to i32
    %c0_i32_3 = arith.constant 0 : i32
    %6 = arith.cmpi ne, %5, %c0_i32_3 : i32
    scf.if %6 {
      %c0_8 = arith.constant 0 : index
      %c0_9 = arith.constant 0 : index
      %13 = vector.load %arg1[%c0_8, %c0_9] : memref<8x384xf32, #tpu.memory_space<vmem>>, vector<8x384xf32>
      %14 = arith.mulf %13, %13 : vector<8x384xf32>
      %15 = arith.truncf %14 : vector<8x384xf32> to vector<8x384xbf16>
      %16 = arith.extf %15 : vector<8x384xbf16> to vector<8x384xf32>
      %17 = arith.subf %14, %16 : vector<8x384xf32>
      %18 = arith.truncf %17 : vector<8x384xf32> to vector<8x384xbf16>
      %cst = arith.constant dense<0.000000e+00> : vector<8x128xf32>
      %19 = tpu.matmul %15, %3, %cst {dimension_numbers = #tpu.dot_dimension_numbers<[1], [0], [0], [1], [0, 0, 1, 1], [], []>} : vector<8x384xbf16>, vector<384x128xbf16>, vector<8x128xf32> -> vector<8x128xf32>
      %cst_10 = arith.constant dense<0.000000e+00> : vector<8x128xf32>
      %20 = tpu.matmul %18, %3, %cst_10 {dimension_numbers = #tpu.dot_dimension_numbers<[1], [0], [0], [1], [0, 0, 1, 1], [], []>} : vector<8x384xbf16>, vector<384x128xbf16>, vector<8x128xf32> -> vector<8x128xf32>
      %21 = arith.addf %19, %20 : vector<8x128xf32>
      %22 = math.sqrt %21 : vector<8x128xf32>
      %c0_11 = arith.constant 0 : index
      %c0_12 = arith.constant 0 : index
      %23 = vector.load %arg6[%c0_11, %c0_12] : memref<8x128xf32, #tpu.memory_space<vmem>>, vector<8x128xf32>
      %24 = arith.maximumf %23, %22 : vector<8x128xf32>
      %c0_13 = arith.constant 0 : index
      %c0_14 = arith.constant 0 : index
      %25 = vector.load %arg6[%c0_13, %c0_14] : memref<8x128xf32, #tpu.memory_space<vmem>>, vector<8x128xf32>
      tpu.vector_store %arg6[%c0_13, %c0_14], %24 {strides = array<i32>} : memref<8x128xf32, #tpu.memory_space<vmem>>, vector<8x128xf32>,
      %c0_15 = arith.constant 0 : index
      %c0_16 = arith.constant 0 : index
      %26 = vector.load %arg7[%c0_15, %c0_16] : memref<8x128xf32, #tpu.memory_space<vmem>>, vector<8x128xf32>
      %27 = arith.minimumf %26, %22 : vector<8x128xf32>
      %c0_17 = arith.constant 0 : index
      %c0_18 = arith.constant 0 : index
      %28 = vector.load %arg7[%c0_17, %c0_18] : memref<8x128xf32, #tpu.memory_space<vmem>>, vector<8x128xf32>
      tpu.vector_store %arg7[%c0_17, %c0_18], %27 {strides = array<i32>} : memref<8x128xf32, #tpu.memory_space<vmem>>, vector<8x128xf32>,
      %c0_19 = arith.constant 0 : index
      %c0_20 = arith.constant 0 : index
      %29 = vector.load %arg8[%c0_19, %c0_20] : memref<8x128xf32, #tpu.memory_space<vmem>>, vector<8x128xf32>
      %30 = arith.addf %29, %22 : vector<8x128xf32>
      %c0_21 = arith.constant 0 : index
      %c0_22 = arith.constant 0 : index
      %31 = vector.load %arg8[%c0_21, %c0_22] : memref<8x128xf32, #tpu.memory_space<vmem>>, vector<8x128xf32>
      tpu.vector_store %arg8[%c0_21, %c0_22], %30 {strides = array<i32>} : memref<8x128xf32, #tpu.memory_space<vmem>>, vector<8x128xf32>,
    } else {
    }
    %c0_i32_4 = arith.constant 0 : i32
    %7 = arith.cmpi eq, %arg0, %c0_i32_4 : i32
    %8 = arith.extui %7 : i1 to i32
    %c0_i32_5 = arith.constant 0 : i32
    %9 = arith.cmpi ne, %8, %c0_i32_5 : i32
    scf.if %9 {
      %c0_8 = arith.constant 0 : index
      %c0_9 = arith.constant 0 : index
      %13 = vector.load %arg1[%c0_8, %c0_9] : memref<8x384xf32, #tpu.memory_space<vmem>>, vector<8x384xf32>
      %14 = arith.mulf %13, %13 : vector<8x384xf32>
      %15 = arith.truncf %14 : vector<8x384xf32> to vector<8x384xbf16>
      %16 = arith.extf %15 : vector<8x384xbf16> to vector<8x384xf32>
      %17 = arith.subf %14, %16 : vector<8x384xf32>
      %18 = arith.truncf %17 : vector<8x384xf32> to vector<8x384xbf16>
      %cst = arith.constant dense<0.000000e+00> : vector<8x128xf32>
      %19 = tpu.matmul %15, %3, %cst {dimension_numbers = #tpu.dot_dimension_numbers<[1], [0], [0], [1], [0, 0, 1, 1], [], []>} : vector<8x384xbf16>, vector<384x128xbf16>, vector<8x128xf32> -> vector<8x128xf32>
      %cst_10 = arith.constant dense<0.000000e+00> : vector<8x128xf32>
      %20 = tpu.matmul %18, %3, %cst_10 {dimension_numbers = #tpu.dot_dimension_numbers<[1], [0], [0], [1], [0, 0, 1, 1], [], []>} : vector<8x384xbf16>, vector<384x128xbf16>, vector<8x128xf32> -> vector<8x128xf32>
      %21 = arith.addf %19, %20 : vector<8x128xf32>
      %22 = math.sqrt %21 : vector<8x128xf32>
      %c8_i32 = arith.constant 8 : i32
      %23 = arith.muli %arg0, %c8_i32 : i32
      %c0_i32_11 = arith.constant 0 : i32
      %24 = arith.addi %23, %c0_i32_11 : i32
      %25 = tpu.iota {dimensions = array<i32: 0>} : vector<8x128xi32>
      %26 = vector.broadcast %24 : i32 to vector<8x128xi32>
      %27 = arith.addi %26, %25 : vector<8x128xi32>
      %c2_i32 = arith.constant 2 : i32
      %28 = vector.broadcast %c2_i32 : i32 to vector<8x128xi32>
      %29 = arith.cmpi slt, %27, %28 : vector<8x128xi32>
      %cst_12 = arith.constant 0xFF800000 : f32
      %30 = vector.broadcast %cst_12 : f32 to vector<8x128xf32>
      %31 = arith.select %29, %22, %30 : vector<8x128xi1>, vector<8x128xf32>
      %cst_13 = arith.constant 0x7F800000 : f32
      %32 = vector.broadcast %cst_13 : f32 to vector<8x128xf32>
      %33 = arith.select %29, %22, %32 : vector<8x128xi1>, vector<8x128xf32>
      %cst_14 = arith.constant 0.000000e+00 : f32
      %34 = vector.broadcast %cst_14 : f32 to vector<8x128xf32>
      %35 = arith.select %29, %22, %34 : vector<8x128xi1>, vector<8x128xf32>
      %c0_15 = arith.constant 0 : index
      %c0_16 = arith.constant 0 : index
      %36 = vector.load %arg6[%c0_15, %c0_16] : memref<8x128xf32, #tpu.memory_space<vmem>>, vector<8x128xf32>
      %37 = arith.maximumf %36, %31 : vector<8x128xf32>
      %c0_17 = arith.constant 0 : index
      %c0_18 = arith.constant 0 : index
      %38 = vector.load %arg6[%c0_17, %c0_18] : memref<8x128xf32, #tpu.memory_space<vmem>>, vector<8x128xf32>
      tpu.vector_store %arg6[%c0_17, %c0_18], %37 {strides = array<i32>} : memref<8x128xf32, #tpu.memory_space<vmem>>, vector<8x128xf32>,
      %c0_19 = arith.constant 0 : index
      %c0_20 = arith.constant 0 : index
      %39 = vector.load %arg7[%c0_19, %c0_20] : memref<8x128xf32, #tpu.memory_space<vmem>>, vector<8x128xf32>
      %40 = arith.minimumf %39, %33 : vector<8x128xf32>
      %c0_21 = arith.constant 0 : index
      %c0_22 = arith.constant 0 : index
      %41 = vector.load %arg7[%c0_21, %c0_22] : memref<8x128xf32, #tpu.memory_space<vmem>>, vector<8x128xf32>
      tpu.vector_store %arg7[%c0_21, %c0_22], %40 {strides = array<i32>} : memref<8x128xf32, #tpu.memory_space<vmem>>, vector<8x128xf32>,
      %c0_23 = arith.constant 0 : index
      %c0_24 = arith.constant 0 : index
      %42 = vector.load %arg8[%c0_23, %c0_24] : memref<8x128xf32, #tpu.memory_space<vmem>>, vector<8x128xf32>
      %43 = arith.addf %42, %35 : vector<8x128xf32>
      %c0_25 = arith.constant 0 : index
      %c0_26 = arith.constant 0 : index
      %44 = vector.load %arg8[%c0_25, %c0_26] : memref<8x128xf32, #tpu.memory_space<vmem>>, vector<8x128xf32>
      tpu.vector_store %arg8[%c0_25, %c0_26], %43 {strides = array<i32>} : memref<8x128xf32, #tpu.memory_space<vmem>>, vector<8x128xf32>,
    } else {
    }
    %c0_i32_6 = arith.constant 0 : i32
    %10 = arith.cmpi eq, %arg0, %c0_i32_6 : i32
    %11 = arith.extui %10 : i1 to i32
    %c0_i32_7 = arith.constant 0 : i32
    %12 = arith.cmpi ne, %11, %c0_i32_7 : i32
    scf.if %12 {
      %c0_8 = arith.constant 0 : index
      %c0_9 = arith.constant 0 : index
      %13 = vector.load %arg6[%c0_8, %c0_9] : memref<8x128xf32, #tpu.memory_space<vmem>>, vector<8x128xf32>
      %cst = arith.constant dense<0xFF800000> : vector<128xf32>
      %14 = vector.multi_reduction <maximumf>, %13, %cst [0] : vector<8x128xf32> to vector<128xf32>
      %15 = vector.shape_cast %14 : vector<128xf32> to vector<1x128xf32>
      %16 = vector.shape_cast %15 : vector<1x128xf32> to vector<1x128xf32>
      %17 = vector.broadcast %16 : vector<1x128xf32> to vector<8x128xf32>
      %c0_10 = arith.constant 0 : index
      %c0_11 = arith.constant 0 : index
      %18 = vector.load %arg2[%c0_10, %c0_11] : memref<8x128xf32, #tpu.memory_space<vmem>>, vector<8x128xf32>
      tpu.vector_store %arg2[%c0_10, %c0_11], %17 {strides = array<i32>} : memref<8x128xf32, #tpu.memory_space<vmem>>, vector<8x128xf32>,
      %c0_12 = arith.constant 0 : index
      %c0_13 = arith.constant 0 : index
      %19 = vector.load %arg7[%c0_12, %c0_13] : memref<8x128xf32, #tpu.memory_space<vmem>>, vector<8x128xf32>
      %cst_14 = arith.constant dense<0x7F800000> : vector<128xf32>
      %20 = vector.multi_reduction <minimumf>, %19, %cst_14 [0] : vector<8x128xf32> to vector<128xf32>
      %21 = vector.shape_cast %20 : vector<128xf32> to vector<1x128xf32>
      %22 = vector.shape_cast %21 : vector<1x128xf32> to vector<1x128xf32>
      %23 = vector.broadcast %22 : vector<1x128xf32> to vector<8x128xf32>
      %c0_15 = arith.constant 0 : index
      %c0_16 = arith.constant 0 : index
      %24 = vector.load %arg3[%c0_15, %c0_16] : memref<8x128xf32, #tpu.memory_space<vmem>>, vector<8x128xf32>
      tpu.vector_store %arg3[%c0_15, %c0_16], %23 {strides = array<i32>} : memref<8x128xf32, #tpu.memory_space<vmem>>, vector<8x128xf32>,
      %c0_17 = arith.constant 0 : index
      %c0_18 = arith.constant 0 : index
      %25 = vector.load %arg8[%c0_17, %c0_18] : memref<8x128xf32, #tpu.memory_space<vmem>>, vector<8x128xf32>
      %cst_19 = arith.constant dense<0.000000e+00> : vector<128xf32>
      %26 = vector.multi_reduction <add>, %25, %cst_19 [0] : vector<8x128xf32> to vector<128xf32>
      %27 = vector.shape_cast %26 : vector<128xf32> to vector<1x128xf32>
      %28 = vector.shape_cast %27 : vector<1x128xf32> to vector<1x128xf32>
      %29 = vector.broadcast %28 : vector<1x128xf32> to vector<8x128xf32>
      %c0_20 = arith.constant 0 : index
      %c0_21 = arith.constant 0 : index
      %30 = vector.load %arg4[%c0_20, %c0_21] : memref<8x128xf32, #tpu.memory_space<vmem>>, vector<8x128xf32>
      tpu.vector_store %arg4[%c0_20, %c0_21], %29 {strides = array<i32>} : memref<8x128xf32, #tpu.memory_space<vmem>>, vector<8x128xf32>,
    } else {
    }
    return
  }
  func.func @transform_0(%arg0: i32) -> (i32, i32) {
    %c0_i32 = arith.constant 0 : i32
    %c0_i32_0 = arith.constant 0 : i32
    return %arg0, %c0_i32 : i32, i32
  }
  func.func @transform_1(%arg0: i32) -> (i32, i32) {
    %c0_i32 = arith.constant 0 : i32
    %c0_i32_0 = arith.constant 0 : i32
    %c0_i32_1 = arith.constant 0 : i32
    return %c0_i32, %c0_i32_0 : i32, i32
  }
  func.func @transform_2(%arg0: i32) -> (i32, i32) {
    %c0_i32 = arith.constant 0 : i32
    %c0_i32_0 = arith.constant 0 : i32
    %c0_i32_1 = arith.constant 0 : i32
    return %c0_i32, %c0_i32_0 : i32, i32
  }
  func.func @transform_3(%arg0: i32) -> (i32, i32) {
    %c0_i32 = arith.constant 0 : i32
    %c0_i32_0 = arith.constant 0 : i32
    %c0_i32_1 = arith.constant 0 : i32
    return %c0_i32, %c0_i32_0 : i32, i32
  }
}

</mosaic_0001>

<llo_original>
// kernel: tpu_custom_call.1
$region0: #{tpu_custom_call.1}
  #allocation0 [shape = 'u32[]', space=smem, size = 0x4, offset = 0x4, fixed_abs, tag = 'smem constant byte address 0x4 - core index']
  #allocation1 [shape = 'u32[144,128]{1,0:T(1,128)}', space=vmem, size = 0x12000, scoped, tag = 'internal scratch']
  #allocation2 [shape = 'bf16[384,128]{1,0:T(16,128)(2,1)}', space=vmem, size = 0x18000, scoped, tag = 'scratch operand']
  #allocation3 [shape = 'f32[8,128]{1,0:T(8,128)}', space=vmem, size = 0x1000, scoped, tag = 'scratch operand']
  #allocation4 [shape = 'f32[8,128]{1,0:T(8,128)}', space=vmem, size = 0x1000, scoped, tag = 'scratch operand']
  #allocation5 [shape = 'f32[8,128]{1,0:T(8,128)}', space=vmem, size = 0x1000, scoped, tag = 'scratch operand']
  %s0 = inlined_call_operand.hbm [shape: f32[2,384], index: 0, kind: input, shape index: {}]
  %s1 = inlined_call_operand.hbm [shape: f32[8,128], index: 1, kind: output, shape index: {0}]
  %s2 = inlined_call_operand.hbm [shape: f32[8,128], index: 2, kind: output, shape index: {1}]
  %s3 = inlined_call_operand.hbm [shape: f32[8,128], index: 3, kind: output, shape index: {2}]
  %4 = xla_tuple %s1, %s2, %s3
  %s5 = sld [smem:[#allocation0]]
  $region46: #{tpu_custom_call.1} parent=0
    _
  %s7 = ssub.s32 1, %s5
  %s8 = scalar_select 0, %s7, %s5
  $region1: #{tpu_custom_call.1} parent=0
    #allocation6 [shape = 'u8[12288]{0}', space=vmem, size = 0x3000, scoped, tag = 'input window, operand 0, single buffered']
    #allocation7 [shape = 's32[1]{0}', space=sflag, size = 0x4, scoped, tag = 'scoped memory for tpu_custom_call.1']
    #allocation8 [shape = 's32[1]{0}', space=sflag, size = 0x4, scoped, tag = 'scoped memory for tpu_custom_call.1']
    #allocation9 [shape = 'u8[4096]{0}', space=vmem, size = 0x1000, scoped, tag = 'output window, operand 0, single buffered']
    #allocation10 [shape = 'u8[4096]{0}', space=vmem, size = 0x1000, scoped, tag = 'output window, operand 1, single buffered']
    #allocation11 [shape = 's32[1]{0}', space=sflag, size = 0x4, scoped, tag = 'scoped memory for tpu_custom_call.1']
    #allocation12 [shape = 'u8[4096]{0}', space=vmem, size = 0x1000, scoped, tag = 'output window, operand 2, single buffered']
    %9 = vsyncpa [#allocation7], 0
    %10 = vsyncpa [#allocation8], 0
    %11 = vsyncpa [#allocation11], 0
    // Predicated region
    $region2: #{tpu_custom_call.1} parent=1 // pred_check
      _
    $region3: #{tpu_custom_call.1} parent=1 // pred_check_branch
      %13 = sbr.rel (0) target = $region5
    $region4: #{tpu_custom_call.1} parent=1 // pred_region
      %s15 = ssub.s32 384, 96
      %16 = vsyncadd [#allocation7], %s15
      %s17 = sshll.u32 [#allocation6], 4
      %s18 = int_to_ptr.vmem [resolvable:$true] %s17
      %23 = dma.hbm_to_vmem [thread:$0]  %s0, 96, %s18, [#allocation7], 96, 96, 6
    $region5: #{tpu_custom_call.1} parent=1 // pred_fallthru
      _
    // Predicated region
    $region6: #{tpu_custom_call.1} parent=1 // pred_check
      _
    $region7: #{tpu_custom_call.1} parent=1 // pred_check_branch
      %25 = sbr.rel (0) target = $region9
    $region8: #{tpu_custom_call.1} parent=1 // pred_region
      %26 = dma.done [#allocation7], 384
    $region9: #{tpu_custom_call.1} parent=1 // pred_fallthru
      _
    %p28 = scmp.eq.s32.totalorder 0, 0
    // Predicated region
    $region10: #{tpu_custom_call.1} parent=1 // pred_check
      %p29 = pneg %p28
    $region11: #{tpu_custom_call.1} parent=1 // pred_check_branch
      %31 = sbr.rel (%p29) target = $region13
    $region12: #{tpu_custom_call.1} parent=1 // pred_region
      %v32 = vlaneseq
      %v33 = vshrl.u32 %v32, 7
      %v34 = vadd.s32 %v33, 8
      %v35 = vadd.s32 %v33, 16
      %v36 = vadd.s32 %v33, 24
      %v37 = vadd.s32 %v33, 32
      %v38 = vadd.s32 %v33, 40
      %v39 = vadd.s32 %v33, 48
      %v40 = vadd.s32 %v33, 56
      %v41 = vadd.s32 %v33, 64
      %v42 = vadd.s32 %v33, 72
      %v43 = vadd.s32 %v33, 80
      %v44 = vadd.s32 %v33, 88
      %v45 = vadd.s32 %v33, 96
      %v46 = vadd.s32 %v33, 104
      %v47 = vadd.s32 %v33, 112
      %v48 = vadd.s32 %v33, 120
      %v49 = vadd.s32 %v33, 128
      %v50 = vadd.s32 %v33, 136
      %v51 = vadd.s32 %v33, 144
      %v52 = vadd.s32 %v33, 152
      %v53 = vadd.s32 %v33, 160
      %v54 = vadd.s32 %v33, 168
      %v55 = vadd.s32 %v33, 176
      %v56 = vadd.s32 %v33, 184
      %v57 = vadd.s32 %v33, 192
      %v58 = vadd.s32 %v33, 200
      %v59 = vadd.s32 %v33, 208
      %v60 = vadd.s32 %v33, 216
      %v61 = vadd.s32 %v33, 224
      %v62 = vadd.s32 %v33, 232
      %v63 = vadd.s32 %v33, 240
      %v64 = vadd.s32 %v33, 248
      %v65 = vadd.s32 %v33, 256
      %v66 = vadd.s32 %v33, 264
      %v67 = vadd.s32 %v33, 272
      %v68 = vadd.s32 %v33, 280
      %v69 = vadd.s32 %v33, 288
      %v70 = vadd.s32 %v33, 296
      %v71 = vadd.s32 %v33, 304
      %v72 = vadd.s32 %v33, 312
      %v73 = vadd.s32 %v33, 320
      %v74 = vadd.s32 %v33, 328
      %v75 = vadd.s32 %v33, 336
      %v76 = vadd.s32 %v33, 344
      %v77 = vadd.s32 %v33, 352
      %v78 = vadd.s32 %v33, 360
      %v79 = vadd.s32 %v33, 368
      %v80 = vadd.s32 %v33, 376
      %v81 = vlaneseq
      %v82 = vand.u32 %v81, 127
      %v83 = vmul.u32 %v82, 3
      %vm84 = vcmp.ge.s32.totalorder %v33, %v83
      %vm85 = vcmp.ge.s32.totalorder %v34, %v83
      %vm86 = vcmp.ge.s32.totalorder %v35, %v83
      %vm87 = vcmp.ge.s32.totalorder %v36, %v83
      %vm88 = vcmp.ge.s32.totalorder %v37, %v83
      %vm89 = vcmp.ge.s32.totalorder %v38, %v83
      %vm90 = vcmp.ge.s32.totalorder %v39, %v83
      %vm91 = vcmp.ge.s32.totalorder %v40, %v83
      %vm92 = vcmp.ge.s32.totalorder %v41, %v83
      %vm93 = vcmp.ge.s32.totalorder %v42, %v83
      %vm94 = vcmp.ge.s32.totalorder %v43, %v83
      %vm95 = vcmp.ge.s32.totalorder %v44, %v83
      %vm96 = vcmp.ge.s32.totalorder %v45, %v83
      %vm97 = vcmp.ge.s32.totalorder %v46, %v83
      %vm98 = vcmp.ge.s32.totalorder %v47, %v83
      %vm99 = vcmp.ge.s32.totalorder %v48, %v83
      %vm100 = vcmp.ge.s32.totalorder %v49, %v83
      %vm101 = vcmp.ge.s32.totalorder %v50, %v83
      %vm102 = vcmp.ge.s32.totalorder %v51, %v83
      %vm103 = vcmp.ge.s32.totalorder %v52, %v83
      %vm104 = vcmp.ge.s32.totalorder %v53, %v83
      %vm105 = vcmp.ge.s32.totalorder %v54, %v83
      %vm106 = vcmp.ge.s32.totalorder %v55, %v83
      %vm107 = vcmp.ge.s32.totalorder %v56, %v83
      %vm108 = vcmp.ge.s32.totalorder %v57, %v83
      %vm109 = vcmp.ge.s32.totalorder %v58, %v83
      %vm110 = vcmp.ge.s32.totalorder %v59, %v83
      %vm111 = vcmp.ge.s32.totalorder %v60, %v83
      %vm112 = vcmp.ge.s32.totalorder %v61, %v83
      %vm113 = vcmp.ge.s32.totalorder %v62, %v83
      %vm114 = vcmp.ge.s32.totalorder %v63, %v83
      %vm115 = vcmp.ge.s32.totalorder %v64, %v83
      %vm116 = vcmp.ge.s32.totalorder %v65, %v83
      %vm117 = vcmp.ge.s32.totalorder %v66, %v83
      %vm118 = vcmp.ge.s32.totalorder %v67, %v83
      %vm119 = vcmp.ge.s32.totalorder %v68, %v83
      %vm120 = vcmp.ge.s32.totalorder %v69, %v83
      %vm121 = vcmp.ge.s32.totalorder %v70, %v83
      %vm122 = vcmp.ge.s32.totalorder %v71, %v83
      %vm123 = vcmp.ge.s32.totalorder %v72, %v83
      %vm124 = vcmp.ge.s32.totalorder %v73, %v83
      %vm125 = vcmp.ge.s32.totalorder %v74, %v83
      %vm126 = vcmp.ge.s32.totalorder %v75, %v83
      %vm127 = vcmp.ge.s32.totalorder %v76, %v83
      %vm128 = vcmp.ge.s32.totalorder %v77, %v83
      %vm129 = vcmp.ge.s32.totalorder %v78, %v83
      %vm130 = vcmp.ge.s32.totalorder %v79, %v83
      %vm131 = vcmp.ge.s32.totalorder %v80, %v83
      %v132 = vadd.s32 %v83, 3
      %vm133 = vcmp.lt.s32.totalorder %v33, %v132
      %vm134 = vcmp.lt.s32.totalorder %v34, %v132
      %vm135 = vcmp.lt.s32.totalorder %v35, %v132
      %vm136 = vcmp.lt.s32.totalorder %v36, %v132
      %vm137 = vcmp.lt.s32.totalorder %v37, %v132
      %vm138 = vcmp.lt.s32.totalorder %v38, %v132
      %vm139 = vcmp.lt.s32.totalorder %v39, %v132
      %vm140 = vcmp.lt.s32.totalorder %v40, %v132
      %vm141 = vcmp.lt.s32.totalorder %v41, %v132
      %vm142 = vcmp.lt.s32.totalorder %v42, %v132
      %vm143 = vcmp.lt.s32.totalorder %v43, %v132
      %vm144 = vcmp.lt.s32.totalorder %v44, %v132
      %vm145 = vcmp.lt.s32.totalorder %v45, %v132
      %vm146 = vcmp.lt.s32.totalorder %v46, %v132
      %vm147 = vcmp.lt.s32.totalorder %v47, %v132
      %vm148 = vcmp.lt.s32.totalorder %v48, %v132
      %vm149 = vcmp.lt.s32.totalorder %v49, %v132
      %vm150 = vcmp.lt.s32.totalorder %v50, %v132
      %vm151 = vcmp.lt.s32.totalorder %v51, %v132
      %vm152 = vcmp.lt.s32.totalorder %v52, %v132
      %vm153 = vcmp.lt.s32.totalorder %v53, %v132
      %vm154 = vcmp.lt.s32.totalorder %v54, %v132
      %vm155 = vcmp.lt.s32.totalorder %v55, %v132
      %vm156 = vcmp.lt.s32.totalorder %v56, %v132
      %vm157 = vcmp.lt.s32.totalorder %v57, %v132
      %vm158 = vcmp.lt.s32.totalorder %v58, %v132
      %vm159 = vcmp.lt.s32.totalorder %v59, %v132
      %vm160 = vcmp.lt.s32.totalorder %v60, %v132
      %vm161 = vcmp.lt.s32.totalorder %v61, %v132
      %vm162 = vcmp.lt.s32.totalorder %v62, %v132
      %vm163 = vcmp.lt.s32.totalorder %v63, %v132
      %vm164 = vcmp.lt.s32.totalorder %v64, %v132
      %vm165 = vcmp.lt.s32.totalorder %v65, %v132
      %vm166 = vcmp.lt.s32.totalorder %v66, %v132
      %vm167 = vcmp.lt.s32.totalorder %v67, %v132
      %vm168 = vcmp.lt.s32.totalorder %v68, %v132
      %vm169 = vcmp.lt.s32.totalorder %v69, %v132
      %vm170 = vcmp.lt.s32.totalorder %v70, %v132
      %vm171 = vcmp.lt.s32.totalorder %v71, %v132
      %vm172 = vcmp.lt.s32.totalorder %v72, %v132
      %vm173 = vcmp.lt.s32.totalorder %v73, %v132
      %vm174 = vcmp.lt.s32.totalorder %v74, %v132
      %vm175 = vcmp.lt.s32.totalorder %v75, %v132
      %vm176 = vcmp.lt.s32.totalorder %v76, %v132
      %vm177 = vcmp.lt.s32.totalorder %v77, %v132
      %vm178 = vcmp.lt.s32.totalorder %v78, %v132
      %vm179 = vcmp.lt.s32.totalorder %v79, %v132
      %vm180 = vcmp.lt.s32.totalorder %v80, %v132
      %vm181 = vmand %vm84, %vm133
      %vm182 = vmand %vm85, %vm134
      %vm183 = vmand %vm86, %vm135
      %vm184 = vmand %vm87, %vm136
      %vm185 = vmand %vm88, %vm137
      %vm186 = vmand %vm89, %vm138
      %vm187 = vmand %vm90, %vm139
      %vm188 = vmand %vm91, %vm140
      %vm189 = vmand %vm92, %vm141
      %vm190 = vmand %vm93, %vm142
      %vm191 = vmand %vm94, %vm143
      %vm192 = vmand %vm95, %vm144
      %vm193 = vmand %vm96, %vm145
      %vm194 = vmand %vm97, %vm146
      %vm195 = vmand %vm98, %vm147
      %vm196 = vmand %vm99, %vm148
      %vm197 = vmand %vm100, %vm149
      %vm198 = vmand %vm101, %vm150
      %vm199 = vmand %vm102, %vm151
      %vm200 = vmand %vm103, %vm152
      %vm201 = vmand %vm104, %vm153
      %vm202 = vmand %vm105, %vm154
      %vm203 = vmand %vm106, %vm155
      %vm204 = vmand %vm107, %vm156
      %vm205 = vmand %vm108, %vm157
      %vm206 = vmand %vm109, %vm158
      %vm207 = vmand %vm110, %vm159
      %vm208 = vmand %vm111, %vm160
      %vm209 = vmand %vm112, %vm161
      %vm210 = vmand %vm113, %vm162
      %vm211 = vmand %vm114, %vm163
      %vm212 = vmand %vm115, %vm164
      %vm213 = vmand %vm116, %vm165
      %vm214 = vmand %vm117, %vm166
      %vm215 = vmand %vm118, %vm167
      %vm216 = vmand %vm119, %vm168
      %vm217 = vmand %vm120, %vm169
      %vm218 = vmand %vm121, %vm170
      %vm219 = vmand %vm122, %vm171
      %vm220 = vmand %vm123, %vm172
      %vm221 = vmand %vm124, %vm173
      %vm222 = vmand %vm125, %vm174
      %vm223 = vmand %vm126, %vm175
      %vm224 = vmand %vm127, %vm176
      %vm225 = vmand %vm128, %vm177
      %vm226 = vmand %vm129, %vm178
      %vm227 = vmand %vm130, %vm179
      %vm228 = vmand %vm131, %vm180
      %v229 = vsel %vm181, 1.0, 0.0
      %v230 = vsel %vm182, 1.0, 0.0
      %v231 = vsel %vm183, 1.0, 0.0
      %v232 = vsel %vm184, 1.0, 0.0
      %v233 = vsel %vm185, 1.0, 0.0
      %v234 = vsel %vm186, 1.0, 0.0
      %v235 = vsel %vm187, 1.0, 0.0
      %v236 = vsel %vm188, 1.0, 0.0
      %v237 = vsel %vm189, 1.0, 0.0
      %v238 = vsel %vm190, 1.0, 0.0
      %v239 = vsel %vm191, 1.0, 0.0
      %v240 = vsel %vm192, 1.0, 0.0
      %v241 = vsel %vm193, 1.0, 0.0
      %v242 = vsel %vm194, 1.0, 0.0
      %v243 = vsel %vm195, 1.0, 0.0
      %v244 = vsel %vm196, 1.0, 0.0
      %v245 = vsel %vm197, 1.0, 0.0
      %v246 = vsel %vm198, 1.0, 0.0
      %v247 = vsel %vm199, 1.0, 0.0
      %v248 = vsel %vm200, 1.0, 0.0
      %v249 = vsel %vm201, 1.0, 0.0
      %v250 = vsel %vm202, 1.0, 0.0
      %v251 = vsel %vm203, 1.0, 0.0
      %v252 = vsel %vm204, 1.0, 0.0
      %v253 = vsel %vm205, 1.0, 0.0
      %v254 = vsel %vm206, 1.0, 0.0
      %v255 = vsel %vm207, 1.0, 0.0
      %v256 = vsel %vm208, 1.0, 0.0
      %v257 = vsel %vm209, 1.0, 0.0
      %v258 = vsel %vm210, 1.0, 0.0
      %v259 = vsel %vm211, 1.0, 0.0
      %v260 = vsel %vm212, 1.0, 0.0
      %v261 = vsel %vm213, 1.0, 0.0
      %v262 = vsel %vm214, 1.0, 0.0
      %v263 = vsel %vm215, 1.0, 0.0
      %v264 = vsel %vm216, 1.0, 0.0
      %v265 = vsel %vm217, 1.0, 0.0
      %v266 = vsel %vm218, 1.0, 0.0
      %v267 = vsel %vm219, 1.0, 0.0
      %v268 = vsel %vm220, 1.0, 0.0
      %v269 = vsel %vm221, 1.0, 0.0
      %v270 = vsel %vm222, 1.0, 0.0
      %v271 = vsel %vm223, 1.0, 0.0
      %v272 = vsel %vm224, 1.0, 0.0
      %v273 = vsel %vm225, 1.0, 0.0
      %v274 = vsel %vm226, 1.0, 0.0
      %v275 = vsel %vm227, 1.0, 0.0
      %v276 = vsel %vm228, 1.0, 0.0
      %v277 = vpack.c.bf16 %v230, %v229
      %v278 = vpack.c.bf16 %v232, %v231
      %v279 = vpack.c.bf16 %v234, %v233
      %v280 = vpack.c.bf16 %v236, %v235
      %v281 = vpack.c.bf16 %v238, %v237
      %v282 = vpack.c.bf16 %v240, %v239
      %v283 = vpack.c.bf16 %v242, %v241
      %v284 = vpack.c.bf16 %v244, %v243
      %v285 = vpack.c.bf16 %v246, %v245
      %v286 = vpack.c.bf16 %v248, %v247
      %v287 = vpack.c.bf16 %v250, %v249
      %v288 = vpack.c.bf16 %v252, %v251
      %v289 = vpack.c.bf16 %v254, %v253
      %v290 = vpack.c.bf16 %v256, %v255
      %v291 = vpack.c.bf16 %v258, %v257
      %v292 = vpack.c.bf16 %v260, %v259
      %v293 = vpack.c.bf16 %v262, %v261
      %v294 = vpack.c.bf16 %v264, %v263
      %v295 = vpack.c.bf16 %v266, %v265
      %v296 = vpack.c.bf16 %v268, %v267
      %v297 = vpack.c.bf16 %v270, %v269
      %v298 = vpack.c.bf16 %v272, %v271
      %v299 = vpack.c.bf16 %v274, %v273
      %v300 = vpack.c.bf16 %v276, %v275
      %301 = vst [vmem:[#allocation2] sm:$0xff] %v277
      %302 = vst [vmem:[#allocation2 + $0x8] sm:$0xff] %v278
      %303 = vst [vmem:[#allocation2 + $0x10] sm:$0xff] %v279
      %304 = vst [vmem:[#allocation2 + $0x18] sm:$0xff] %v280
      %305 = vst [vmem:[#allocation2 + $0x20] sm:$0xff] %v281
      %306 = vst [vmem:[#allocation2 + $0x28] sm:$0xff] %v282
      %307 = vst [vmem:[#allocation2 + $0x30] sm:$0xff] %v283
      %308 = vst [vmem:[#allocation2 + $0x38] sm:$0xff] %v284
      %309 = vst [vmem:[#allocation2 + $0x40] sm:$0xff] %v285
      %310 = vst [vmem:[#allocation2 + $0x48] sm:$0xff] %v286
      %311 = vst [vmem:[#allocation2 + $0x50] sm:$0xff] %v287
      %312 = vst [vmem:[#allocation2 + $0x58] sm:$0xff] %v288
      %313 = vst [vmem:[#allocation2 + $0x60] sm:$0xff] %v289
      %314 = vst [vmem:[#allocation2 + $0x68] sm:$0xff] %v290
      %315 = vst [vmem:[#allocation2 + $0x70] sm:$0xff] %v291
      %316 = vst [vmem:[#allocation2 + $0x78] sm:$0xff] %v292
      %317 = vst [vmem:[#allocation2 + $0x80] sm:$0xff] %v293
      %318 = vst [vmem:[#allocation2 + $0x88] sm:$0xff] %v294
      %319 = vst [vmem:[#allocation2 + $0x90] sm:$0xff] %v295
      %320 = vst [vmem:[#allocation2 + $0x98] sm:$0xff] %v296
      %321 = vst [vmem:[#allocation2 + $0xa0] sm:$0xff] %v297
      %322 = vst [vmem:[#allocation2 + $0xa8] sm:$0xff] %v298
      %323 = vst [vmem:[#allocation2 + $0xb0] sm:$0xff] %v299
      %324 = vst [vmem:[#allocation2 + $0xb8] sm:$0xff] %v300
      %325 = vst [vmem:[#allocation3] sm:$0xff] -inf
      %326 = vst [vmem:[#allocation4] sm:$0xff] inf
      %327 = vst [vmem:[#allocation5] sm:$0xff] 0.0
    $region13: #{tpu_custom_call.1} parent=1 // pred_fallthru
      _
    %v328 = vld [vmem:[#allocation2] sm:$0xff]
    %v329 = vld [vmem:[#allocation2 + $0x8] sm:$0xff]
    %v330 = vld [vmem:[#allocation2 + $0x10] sm:$0xff]
    %v331 = vld [vmem:[#allocation2 + $0x18] sm:$0xff]
    %v332 = vld [vmem:[#allocation2 + $0x20] sm:$0xff]
    %v333 = vld [vmem:[#allocation2 + $0x28] sm:$0xff]
    %v334 = vld [vmem:[#allocation2 + $0x30] sm:$0xff]
    %v335 = vld [vmem:[#allocation2 + $0x38] sm:$0xff]
    %v336 = vld [vmem:[#allocation2 + $0x40] sm:$0xff]
    %v337 = vld [vmem:[#allocation2 + $0x48] sm:$0xff]
    %v338 = vld [vmem:[#allocation2 + $0x50] sm:$0xff]
    %v339 = vld [vmem:[#allocation2 + $0x58] sm:$0xff]
    %v340 = vld [vmem:[#allocation2 + $0x60] sm:$0xff]
    %v341 = vld [vmem:[#allocation2 + $0x68] sm:$0xff]
    %v342 = vld [vmem:[#allocation2 + $0x70] sm:$0xff]
    %v343 = vld [vmem:[#allocation2 + $0x78] sm:$0xff]
    %v344 = vld [vmem:[#allocation2 + $0x80] sm:$0xff]
    %v345 = vld [vmem:[#allocation2 + $0x88] sm:$0xff]
    %v346 = vld [vmem:[#allocation2 + $0x90] sm:$0xff]
    %v347 = vld [vmem:[#allocation2 + $0x98] sm:$0xff]
    %v348 = vld [vmem:[#allocation2 + $0xa0] sm:$0xff]
    %v349 = vld [vmem:[#allocation2 + $0xa8] sm:$0xff]
    %v350 = vld [vmem:[#allocation2 + $0xb0] sm:$0xff]
    %v351 = vld [vmem:[#allocation2 + $0xb8] sm:$0xff]
    %p352 = scmp.lt.s32.totalorder 0, 0
    // Predicated region
    $region14: #{tpu_custom_call.1} parent=1 // pred_check
      %p353 = pneg %p352
    $region15: #{tpu_custom_call.1} parent=1 // pred_check_branch
      %355 = sbr.rel (%p353) target = $region17
    $region16: #{tpu_custom_call.1} parent=1 // pred_region
      %v356 = vld [vmem:[#allocation6] sm:$0x3f]
      %v357 = vld [vmem:[#allocation6 + $0x6] sm:$0x3f]
      %v358 = vld [vmem:[#allocation6 + $0xc] sm:$0x3f]
      %v359 = vld [vmem:[#allocation6 + $0x12] sm:$0x3f]
      %v360 = vmul.f32 %v356, %v356
      %v361 = vmul.f32 %v357, %v357
      %v362 = vmul.f32 %v358, %v358
      %v363 = vmul.f32 %v359, %v359
      %v368 = vcombine.low %v360, %v361
      %v369 = vcombine.high %v360, %v361
      %v370 = vcombine.low %v362, %v363
      %v371 = vcombine.high %v362, %v363
      %v373 = vunpack.c.l.s4 1983009808
      %v374 = vunpack.c.0.s8 %v373
      %v375 = vlaneseq
      %v376 = vshrl.u32 %v375, 7
      %v377 = vsub.s32 %v374, %v376
      %v378 = vrot.slane %v368, %v377
      %v380 = vunpack.c.l.s4 1983009808
      %v381 = vunpack.c.0.s8 %v380
      %v382 = vlaneseq
      %v383 = vshrl.u32 %v382, 7
      %v384 = vsub.s32 %v381, %v383
      %v385 = vrot.slane %v369, %v384
      %v387 = vunpack.c.l.s4 1983009808
      %v388 = vunpack.c.0.s8 %v387
      %v389 = vlaneseq
      %v390 = vshrl.u32 %v389, 7
      %v391 = vsub.s32 %v388, %v390
      %v392 = vrot.slane %v370, %v391
      %v394 = vunpack.c.l.s4 1983009808
      %v395 = vunpack.c.0.s8 %v394
      %v396 = vlaneseq
      %v397 = vshrl.u32 %v396, 7
      %v398 = vsub.s32 %v395, %v397
      %v399 = vrot.slane %v371, %v398
      %v400 = vcombine.low %v378, %v392
      %v401 = vcombine.high %v378, %v392
      %v402 = vcombine.low %v385, %v399
      %v406 = vpack.c.bf16 %v400, %v400
      %v407 = vpack.c.bf16 %v401, %v401
      %v408 = vpack.c.bf16 %v402, %v402
      %v409 = vunpack.c.l.bf16 %v406
      %v410 = vunpack.c.l.bf16 %v407
      %v411 = vunpack.c.l.bf16 %v408
      %v415 = vcombine.low %v409, %v410
      %v416 = vcombine.high %v409, %v410
      %v417 = vcombine.high %v411, %v411
      %v419 = vunpack.c.l.s4 1983009808
      %v420 = vunpack.c.0.s8 %v419
      %v421 = vlaneseq
      %v422 = vshrl.u32 %v421, 7
      %v423 = vsub.s32 %v420, %v422
      %v424 = vrot.slane %v415, %v423
      %v426 = vunpack.c.l.s4 1983009808
      %v427 = vunpack.c.0.s8 %v426
      %v428 = vlaneseq
      %v429 = vshrl.u32 %v428, 7
      %v430 = vsub.s32 %v427, %v429
      %v431 = vrot.slane %v416, %v430
      %v433 = vunpack.c.l.s4 1983009808
      %v434 = vunpack.c.0.s8 %v433
      %v435 = vlaneseq
      %v436 = vshrl.u32 %v435, 7
      %v437 = vsub.s32 %v434, %v436
      %v438 = vrot.slane %v411, %v437
      %v440 = vunpack.c.l.s4 1983009808
      %v441 = vunpack.c.0.s8 %v440
      %v442 = vlaneseq
      %v443 = vshrl.u32 %v442, 7
      %v444 = vsub.s32 %v441, %v443
      %v445 = vrot.slane %v417, %v444
      %v446 = vcombine.low %v424, %v438
      %v447 = vcombine.high %v424, %v438
      %v448 = vcombine.low %v431, %v445
      %v449 = vcombine.high %v431, %v445
      %v454 = vsub.f32 %v360, %v446
      %v455 = vsub.f32 %v361, %v447
      %v456 = vsub.f32 %v362, %v448
      %v457 = vsub.f32 %v363, %v449
      %v462 = vcombine.low %v454, %v455
      %v463 = vcombine.high %v454, %v455
      %v464 = vcombine.low %v456, %v457
      %v465 = vcombine.high %v456, %v457
      %v467 = vunpack.c.l.s4 1983009808
      %v468 = vunpack.c.0.s8 %v467
      %v469 = vlaneseq
      %v470 = vshrl.u32 %v469, 7
      %v471 = vsub.s32 %v468, %v470
      %v472 = vrot.slane %v462, %v471
      %v474 = vunpack.c.l.s4 1983009808
      %v475 = vunpack.c.0.s8 %v474
      %v476 = vlaneseq
      %v477 = vshrl.u32 %v476, 7
      %v478 = vsub.s32 %v475, %v477
      %v479 = vrot.slane %v463, %v478
      %v481 = vunpack.c.l.s4 1983009808
      %v482 = vunpack.c.0.s8 %v481
      %v483 = vlaneseq
      %v484 = vshrl.u32 %v483, 7
      %v485 = vsub.s32 %v482, %v484
      %v486 = vrot.slane %v464, %v485
      %v488 = vunpack.c.l.s4 1983009808
      %v489 = vunpack.c.0.s8 %v488
      %v490 = vlaneseq
      %v491 = vshrl.u32 %v490, 7
      %v492 = vsub.s32 %v489, %v491
      %v493 = vrot.slane %v465, %v492
      %v494 = vcombine.low %v472, %v486
      %v495 = vcombine.high %v472, %v486
      %v496 = vcombine.low %v479, %v493
      %v500 = vpack.c.bf16 %v494, %v494
      %v501 = vpack.c.bf16 %v495, %v495
      %v502 = vpack.c.bf16 %v496, %v496
      %503 = vmatprep.subr.bf16.mxu0 0
      %504 = vmatpush1.bf16.msra.mxu0 %v328
      %505 = vmatprep.subr.bf16.mxu0 0
      %506 = vmatpush1.bf16.msra.mxu0 %v329
      %507 = vmatprep.subr.bf16.mxu0 0
      %508 = vmatpush1.bf16.msra.mxu0 %v330
      %509 = vmatprep.subr.bf16.mxu0 0
      %510 = vmatpush1.bf16.msra.mxu0 %v331
      %511 = vmatprep.subr.bf16.mxu0 0
      %512 = vmatpush1.bf16.msra.mxu0 %v332
      %513 = vmatprep.subr.bf16.mxu0 0
      %514 = vmatpush1.bf16.msra.mxu0 %v333
      %515 = vmatprep.subr.bf16.mxu0 0
      %516 = vmatpush1.bf16.msra.mxu0 %v334
      %517 = vmatprep.subr.bf16.mxu0 0
      %518 = vmatpush1.bf16.msra.mxu0 %v335
      %519 = vmatprep.subr.bf16.mxu0 0
      %520 = vmatpush1.bf16.msra.mxu0 %v336
      %521 = vmatprep.subr.bf16.mxu0 0
      %522 = vmatpush1.bf16.msra.mxu0 %v337
      %523 = vmatprep.subr.bf16.mxu0 0
      %524 = vmatpush1.bf16.msra.mxu0 %v338
      %525 = vmatprep.subr.bf16.mxu0 0
      %526 = vmatpush1.bf16.msra.mxu0 %v339
      %527 = vmatprep.subr.bf16.mxu0 0
      %528 = vmatpush1.bf16.msra.mxu0 %v340
      %529 = vmatprep.subr.bf16.mxu0 0
      %530 = vmatpush1.bf16.msra.mxu0 %v341
      %531 = vmatprep.subr.bf16.mxu0 0
      %532 = vmatpush1.bf16.msra.mxu0 %v342
      %533 = vmatprep.subr.bf16.mxu0 0
      %534 = vmatpush1.bf16.msra.mxu0 %v343
      %535 = vmatprep.mubr.bf16.mxu0 %v501
      %536 = vmatmul.mubr.bf16.gmra.mrb[0].mxu0 %v500
      %v537 = vpop.f32.mrb[0].mxu0
      %v538 = vadd.f32 0.0, %v537
      %v539 = vpop.f32.mrb[0].mxu0
      %v540 = vpop.f32.mrb[0].mxu0
      %v541 = vpop.f32.mrb[0].mxu0
      %542 = vdwg.mxu0
      %543 = vmatprep.subr.bf16.mxu0 0
      %544 = vmatpush1.bf16.msra.mxu0 %v344
      %545 = vmatprep.subr.bf16.mxu0 0
      %546 = vmatpush1.bf16.msra.mxu0 %v345
      %547 = vmatprep.subr.bf16.mxu0 0
      %548 = vmatpush1.bf16.msra.mxu0 %v346
      %549 = vmatprep.subr.bf16.mxu0 0
      %550 = vmatpush1.bf16.msra.mxu0 %v347
      %551 = vmatprep.subr.bf16.mxu0 0
      %552 = vmatpush1.bf16.msra.mxu0 %v348
      %553 = vmatprep.subr.bf16.mxu0 0
      %554 = vmatpush1.bf16.msra.mxu0 %v349
      %555 = vmatprep.subr.bf16.mxu0 0
      %556 = vmatpush1.bf16.msra.mxu0 %v350
      %557 = vmatprep.subr.bf16.mxu0 0
      %558 = vmatpush1.bf16.msra.mxu0 %v351
      %559 = vmatprep.subr.bf16.mxu0 0
      %560 = vmatpush1.bf16.msra.mxu0 0
      %561 = vmatprep.subr.bf16.mxu0 0
      %562 = vmatpush1.bf16.msra.mxu0 0
      %563 = vmatprep.subr.bf16.mxu0 0
      %564 = vmatpush1.bf16.msra.mxu0 0
      %565 = vmatprep.subr.bf16.mxu0 0
      %566 = vmatpush1.bf16.msra.mxu0 0
      %567 = vmatprep.subr.bf16.mxu0 0
      %568 = vmatpush1.bf16.msra.mxu0 0
      %569 = vmatprep.subr.bf16.mxu0 0
      %570 = vmatpush1.bf16.msra.mxu0 0
      %571 = vmatprep.subr.bf16.mxu0 0
      %572 = vmatpush1.bf16.msra.mxu0 0
      %573 = vmatprep.subr.bf16.mxu0 0
      %574 = vmatpush1.bf16.msra.mxu0 0
      %575 = vmatprep.mubr.bf16.mxu0 0
      %576 = vmatmul.mubr.bf16.gmra.mrb[0].mxu0 %v502
      %v577 = vpop.f32.mrb[0].mxu0
      %v578 = vadd.f32 %v538, %v577
      %v579 = vpop.f32.mrb[0].mxu0
      %v580 = vpop.f32.mrb[0].mxu0
      %v581 = vpop.f32.mrb[0].mxu0
      %582 = vdwg.mxu0
      %583 = vmatprep.subr.bf16.mxu0 0
      %584 = vmatpush1.bf16.msra.mxu0 %v328
      %585 = vmatprep.subr.bf16.mxu0 0
      %586 = vmatpush1.bf16.msra.mxu0 %v329
      %587 = vmatprep.subr.bf16.mxu0 0
      %588 = vmatpush1.bf16.msra.mxu0 %v330
      %589 = vmatprep.subr.bf16.mxu0 0
      %590 = vmatpush1.bf16.msra.mxu0 %v331
      %591 = vmatprep.subr.bf16.mxu0 0
      %592 = vmatpush1.bf16.msra.mxu0 %v332
      %593 = vmatprep.subr.bf16.mxu0 0
      %594 = vmatpush1.bf16.msra.mxu0 %v333
      %595 = vmatprep.subr.bf16.mxu0 0
      %596 = vmatpush1.bf16.msra.mxu0 %v334
      %597 = vmatprep.subr.bf16.mxu0 0
      %598 = vmatpush1.bf16.msra.mxu0 %v335
      %599 = vmatprep.subr.bf16.mxu0 0
      %600 = vmatpush1.bf16.msra.mxu0 %v336
      %601 = vmatprep.subr.bf16.mxu0 0
      %602 = vmatpush1.bf16.msra.mxu0 %v337
      %603 = vmatprep.subr.bf16.mxu0 0
      %604 = vmatpush1.bf16.msra.mxu0 %v338
      %605 = vmatprep.subr.bf16.mxu0 0
      %606 = vmatpush1.bf16.msra.mxu0 %v339
      %607 = vmatprep.subr.bf16.mxu0 0
      %608 = vmatpush1.bf16.msra.mxu0 %v340
      %609 = vmatprep.subr.bf16.mxu0 0
      %610 = vmatpush1.bf16.msra.mxu0 %v341
      %611 = vmatprep.subr.bf16.mxu0 0
      %612 = vmatpush1.bf16.msra.mxu0 %v342
      %613 = vmatprep.subr.bf16.mxu0 0
      %614 = vmatpush1.bf16.msra.mxu0 %v343
      %615 = vmatprep.mubr.bf16.mxu0 %v407
      %616 = vmatmul.mubr.bf16.gmra.mrb[0].mxu0 %v406
      %v617 = vpop.f32.mrb[0].mxu0
      %v618 = vadd.f32 %v578, %v617
      %v619 = vpop.f32.mrb[0].mxu0
      %v620 = vpop.f32.mrb[0].mxu0
      %v621 = vpop.f32.mrb[0].mxu0
      %622 = vdwg.mxu0
      %623 = vmatprep.subr.bf16.mxu0 0
      %624 = vmatpush1.bf16.msra.mxu0 %v344
      %625 = vmatprep.subr.bf16.mxu0 0
      %626 = vmatpush1.bf16.msra.mxu0 %v345
      %627 = vmatprep.subr.bf16.mxu0 0
      %628 = vmatpush1.bf16.msra.mxu0 %v346
      %629 = vmatprep.subr.bf16.mxu0 0
      %630 = vmatpush1.bf16.msra.mxu0 %v347
      %631 = vmatprep.subr.bf16.mxu0 0
      %632 = vmatpush1.bf16.msra.mxu0 %v348
      %633 = vmatprep.subr.bf16.mxu0 0
      %634 = vmatpush1.bf16.msra.mxu0 %v349
      %635 = vmatprep.subr.bf16.mxu0 0
      %636 = vmatpush1.bf16.msra.mxu0 %v350
      %637 = vmatprep.subr.bf16.mxu0 0
      %638 = vmatpush1.bf16.msra.mxu0 %v351
      %639 = vmatprep.subr.bf16.mxu0 0
      %640 = vmatpush1.bf16.msra.mxu0 0
      %641 = vmatprep.subr.bf16.mxu0 0
      %642 = vmatpush1.bf16.msra.mxu0 0
      %643 = vmatprep.subr.bf16.mxu0 0
      %644 = vmatpush1.bf16.msra.mxu0 0
      %645 = vmatprep.subr.bf16.mxu0 0
      %646 = vmatpush1.bf16.msra.mxu0 0
      %647 = vmatprep.subr.bf16.mxu0 0
      %648 = vmatpush1.bf16.msra.mxu0 0
      %649 = vmatprep.subr.bf16.mxu0 0
      %650 = vmatpush1.bf16.msra.mxu0 0
      %651 = vmatprep.subr.bf16.mxu0 0
      %652 = vmatpush1.bf16.msra.mxu0 0
      %653 = vmatprep.subr.bf16.mxu0 0
      %654 = vmatpush1.bf16.msra.mxu0 0
      %655 = vmatprep.mubr.bf16.mxu0 0
      %656 = vmatmul.mubr.bf16.gmra.mrb[0].mxu0 %v408
      %v657 = vpop.f32.mrb[0].mxu0
      %v658 = vadd.f32 %v618, %v657
      %v659 = vpop.f32.mrb[0].mxu0
      %v660 = vpop.f32.mrb[0].mxu0
      %v661 = vpop.f32.mrb[0].mxu0
      %662 = vdwg.mxu0
      %v663 = vrsqrt.pop %v658
      %v664 = vmul.f32 %v658, %v663
      %vm665 = vcmp.eq.f32.partialorder %v658, inf
      %v666 = vsel %vm665, %v658, %v664
      %vm667 = vcmp.eq.f32.partialorder %v658, 0.0
      %v668 = vand.u32 %v658, 2147483648
      %v669 = vsel %vm667, %v668, %v666
      %v670 = vld [vmem:[#allocation3] sm:$0xff]
      %v671 = vmax.f32 %v670, %v669
      %672 = vst [vmem:[#allocation3] sm:$0xff] %v671
      %v673 = vld [vmem:[#allocation4] sm:$0xff]
      %v674 = vmin.f32 %v673, %v669
      %675 = vst [vmem:[#allocation4] sm:$0xff] %v674
      %v676 = vld [vmem:[#allocation5] sm:$0xff]
      %v677 = vadd.f32 %v676, %v669
      %678 = vst [vmem:[#allocation5] sm:$0xff] %v677
    $region17: #{tpu_custom_call.1} parent=1 // pred_fallthru
      _
    // Predicated region
    $region18: #{tpu_custom_call.1} parent=1 // pred_check
      %p679 = pneg %p28
    $region19: #{tpu_custom_call.1} parent=1 // pred_check_branch
      %681 = sbr.rel (%p679) target = $region21
    $region20: #{tpu_custom_call.1} parent=1 // pred_region
      %v682 = vld [vmem:[#allocation6] sm:$0x3f]
      %v683 = vld [vmem:[#allocation6 + $0x6] sm:$0x3f]
      %v684 = vld [vmem:[#allocation6 + $0xc] sm:$0x3f]
      %v685 = vld [vmem:[#allocation6 + $0x12] sm:$0x3f]
      %v686 = vmul.f32 %v682, %v682
      %v687 = vmul.f32 %v683, %v683
      %v688 = vmul.f32 %v684, %v684
      %v689 = vmul.f32 %v685, %v685
      %v694 = vcombine.low %v686, %v687
      %v695 = vcombine.high %v686, %v687
      %v696 = vcombine.low %v688, %v689
      %v697 = vcombine.high %v688, %v689
      %v699 = vunpack.c.l.s4 1983009808
      %v700 = vunpack.c.0.s8 %v699
      %v701 = vlaneseq
      %v702 = vshrl.u32 %v701, 7
      %v703 = vsub.s32 %v700, %v702
      %v704 = vrot.slane %v694, %v703
      %v706 = vunpack.c.l.s4 1983009808
      %v707 = vunpack.c.0.s8 %v706
      %v708 = vlaneseq
      %v709 = vshrl.u32 %v708, 7
      %v710 = vsub.s32 %v707, %v709
      %v711 = vrot.slane %v695, %v710
      %v713 = vunpack.c.l.s4 1983009808
      %v714 = vunpack.c.0.s8 %v713
      %v715 = vlaneseq
      %v716 = vshrl.u32 %v715, 7
      %v717 = vsub.s32 %v714, %v716
      %v718 = vrot.slane %v696, %v717
      %v720 = vunpack.c.l.s4 1983009808
      %v721 = vunpack.c.0.s8 %v720
      %v722 = vlaneseq
      %v723 = vshrl.u32 %v722, 7
      %v724 = vsub.s32 %v721, %v723
      %v725 = vrot.slane %v697, %v724
      %v726 = vcombine.low %v704, %v718
      %v727 = vcombine.high %v704, %v718
      %v728 = vcombine.low %v711, %v725
      %v732 = vpack.c.bf16 %v726, %v726
      %v733 = vpack.c.bf16 %v727, %v727
      %v734 = vpack.c.bf16 %v728, %v728
      %v735 = vunpack.c.l.bf16 %v732
      %v736 = vunpack.c.l.bf16 %v733
      %v737 = vunpack.c.l.bf16 %v734
      %v741 = vcombine.low %v735, %v736
      %v742 = vcombine.high %v735, %v736
      %v743 = vcombine.high %v737, %v737
      %v745 = vunpack.c.l.s4 1983009808
      %v746 = vunpack.c.0.s8 %v745
      %v747 = vlaneseq
      %v748 = vshrl.u32 %v747, 7
      %v749 = vsub.s32 %v746, %v748
      %v750 = vrot.slane %v741, %v749
      %v752 = vunpack.c.l.s4 1983009808
      %v753 = vunpack.c.0.s8 %v752
      %v754 = vlaneseq
      %v755 = vshrl.u32 %v754, 7
      %v756 = vsub.s32 %v753, %v755
      %v757 = vrot.slane %v742, %v756
      %v759 = vunpack.c.l.s4 1983009808
      %v760 = vunpack.c.0.s8 %v759
      %v761 = vlaneseq
      %v762 = vshrl.u32 %v761, 7
      %v763 = vsub.s32 %v760, %v762
      %v764 = vrot.slane %v737, %v763
      %v766 = vunpack.c.l.s4 1983009808
      %v767 = vunpack.c.0.s8 %v766
      %v768 = vlaneseq
      %v769 = vshrl.u32 %v768, 7
      %v770 = vsub.s32 %v767, %v769
      %v771 = vrot.slane %v743, %v770
      %v772 = vcombine.low %v750, %v764
      %v773 = vcombine.high %v750, %v764
      %v774 = vcombine.low %v757, %v771
      %v775 = vcombine.high %v757, %v771
      %v780 = vsub.f32 %v686, %v772
      %v781 = vsub.f32 %v687, %v773
      %v782 = vsub.f32 %v688, %v774
      %v783 = vsub.f32 %v689, %v775
      %v788 = vcombine.low %v780, %v781
      %v789 = vcombine.high %v780, %v781
      %v790 = vcombine.low %v782, %v783
      %v791 = vcombine.high %v782, %v783
      %v793 = vunpack.c.l.s4 1983009808
      %v794 = vunpack.c.0.s8 %v793
      %v795 = vlaneseq
      %v796 = vshrl.u32 %v795, 7
      %v797 = vsub.s32 %v794, %v796
      %v798 = vrot.slane %v788, %v797
      %v800 = vunpack.c.l.s4 1983009808
      %v801 = vunpack.c.0.s8 %v800
      %v802 = vlaneseq
      %v803 = vshrl.u32 %v802, 7
      %v804 = vsub.s32 %v801, %v803
      %v805 = vrot.slane %v789, %v804
      %v807 = vunpack.c.l.s4 1983009808
      %v808 = vunpack.c.0.s8 %v807
      %v809 = vlaneseq
      %v810 = vshrl.u32 %v809, 7
      %v811 = vsub.s32 %v808, %v810
      %v812 = vrot.slane %v790, %v811
      %v814 = vunpack.c.l.s4 1983009808
      %v815 = vunpack.c.0.s8 %v814
      %v816 = vlaneseq
      %v817 = vshrl.u32 %v816, 7
      %v818 = vsub.s32 %v815, %v817
      %v819 = vrot.slane %v791, %v818
      %v820 = vcombine.low %v798, %v812
      %v821 = vcombine.high %v798, %v812
      %v822 = vcombine.low %v805, %v819
      %v826 = vpack.c.bf16 %v820, %v820
      %v827 = vpack.c.bf16 %v821, %v821
      %v828 = vpack.c.bf16 %v822, %v822
      %829 = vmatprep.subr.bf16.mxu0 0
      %830 = vmatpush1.bf16.msra.mxu0 %v328
      %831 = vmatprep.subr.bf16.mxu0 0
      %832 = vmatpush1.bf16.msra.mxu0 %v329
      %833 = vmatprep.subr.bf16.mxu0 0
      %834 = vmatpush1.bf16.msra.mxu0 %v330
      %835 = vmatprep.subr.bf16.mxu0 0
      %836 = vmatpush1.bf16.msra.mxu0 %v331
      %837 = vmatprep.subr.bf16.mxu0 0
      %838 = vmatpush1.bf16.msra.mxu0 %v332
      %839 = vmatprep.subr.bf16.mxu0 0
      %840 = vmatpush1.bf16.msra.mxu0 %v333
      %841 = vmatprep.subr.bf16.mxu0 0
      %842 = vmatpush1.bf16.msra.mxu0 %v334
      %843 = vmatprep.subr.bf16.mxu0 0
      %844 = vmatpush1.bf16.msra.mxu0 %v335
      %845 = vmatprep.subr.bf16.mxu0 0
      %846 = vmatpush1.bf16.msra.mxu0 %v336
      %847 = vmatprep.subr.bf16.mxu0 0
      %848 = vmatpush1.bf16.msra.mxu0 %v337
      %849 = vmatprep.subr.bf16.mxu0 0
      %850 = vmatpush1.bf16.msra.mxu0 %v338
      %851 = vmatprep.subr.bf16.mxu0 0
      %852 = vmatpush1.bf16.msra.mxu0 %v339
      %853 = vmatprep.subr.bf16.mxu0 0
      %854 = vmatpush1.bf16.msra.mxu0 %v340
      %855 = vmatprep.subr.bf16.mxu0 0
      %856 = vmatpush1.bf16.msra.mxu0 %v341
      %857 = vmatprep.subr.bf16.mxu0 0
      %858 = vmatpush1.bf16.msra.mxu0 %v342
      %859 = vmatprep.subr.bf16.mxu0 0
      %860 = vmatpush1.bf16.msra.mxu0 %v343
      %861 = vmatprep.mubr.bf16.mxu0 %v827
      %862 = vmatmul.mubr.bf16.gmra.mrb[0].mxu0 %v826
      %v863 = vpop.f32.mrb[0].mxu0
      %v864 = vadd.f32 0.0, %v863
      %v865 = vpop.f32.mrb[0].mxu0
      %v866 = vpop.f32.mrb[0].mxu0
      %v867 = vpop.f32.mrb[0].mxu0
      %868 = vdwg.mxu0
      %869 = vmatprep.subr.bf16.mxu0 0
      %870 = vmatpush1.bf16.msra.mxu0 %v344
      %871 = vmatprep.subr.bf16.mxu0 0
      %872 = vmatpush1.bf16.msra.mxu0 %v345
      %873 = vmatprep.subr.bf16.mxu0 0
      %874 = vmatpush1.bf16.msra.mxu0 %v346
      %875 = vmatprep.subr.bf16.mxu0 0
      %876 = vmatpush1.bf16.msra.mxu0 %v347
      %877 = vmatprep.subr.bf16.mxu0 0
      %878 = vmatpush1.bf16.msra.mxu0 %v348
      %879 = vmatprep.subr.bf16.mxu0 0
      %880 = vmatpush1.bf16.msra.mxu0 %v349
      %881 = vmatprep.subr.bf16.mxu0 0
      %882 = vmatpush1.bf16.msra.mxu0 %v350
      %883 = vmatprep.subr.bf16.mxu0 0
      %884 = vmatpush1.bf16.msra.mxu0 %v351
      %885 = vmatprep.subr.bf16.mxu0 0
      %886 = vmatpush1.bf16.msra.mxu0 0
      %887 = vmatprep.subr.bf16.mxu0 0
      %888 = vmatpush1.bf16.msra.mxu0 0
      %889 = vmatprep.subr.bf16.mxu0 0
      %890 = vmatpush1.bf16.msra.mxu0 0
      %891 = vmatprep.subr.bf16.mxu0 0
      %892 = vmatpush1.bf16.msra.mxu0 0
      %893 = vmatprep.subr.bf16.mxu0 0
      %894 = vmatpush1.bf16.msra.mxu0 0
      %895 = vmatprep.subr.bf16.mxu0 0
      %896 = vmatpush1.bf16.msra.mxu0 0
      %897 = vmatprep.subr.bf16.mxu0 0
      %898 = vmatpush1.bf16.msra.mxu0 0
      %899 = vmatprep.subr.bf16.mxu0 0
      %900 = vmatpush1.bf16.msra.mxu0 0
      %901 = vmatprep.mubr.bf16.mxu0 0
      %902 = vmatmul.mubr.bf16.gmra.mrb[0].mxu0 %v828
      %v903 = vpop.f32.mrb[0].mxu0
      %v904 = vadd.f32 %v864, %v903
      %v905 = vpop.f32.mrb[0].mxu0
      %v906 = vpop.f32.mrb[0].mxu0
      %v907 = vpop.f32.mrb[0].mxu0
      %908 = vdwg.mxu0
      %909 = vmatprep.subr.bf16.mxu0 0
      %910 = vmatpush1.bf16.msra.mxu0 %v328
      %911 = vmatprep.subr.bf16.mxu0 0
      %912 = vmatpush1.bf16.msra.mxu0 %v329
      %913 = vmatprep.subr.bf16.mxu0 0
      %914 = vmatpush1.bf16.msra.mxu0 %v330
      %915 = vmatprep.subr.bf16.mxu0 0
      %916 = vmatpush1.bf16.msra.mxu0 %v331
      %917 = vmatprep.subr.bf16.mxu0 0
      %918 = vmatpush1.bf16.msra.mxu0 %v332
      %919 = vmatprep.subr.bf16.mxu0 0
      %920 = vmatpush1.bf16.msra.mxu0 %v333
      %921 = vmatprep.subr.bf16.mxu0 0
      %922 = vmatpush1.bf16.msra.mxu0 %v334
      %923 = vmatprep.subr.bf16.mxu0 0
      %924 = vmatpush1.bf16.msra.mxu0 %v335
      %925 = vmatprep.subr.bf16.mxu0 0
      %926 = vmatpush1.bf16.msra.mxu0 %v336
      %927 = vmatprep.subr.bf16.mxu0 0
      %928 = vmatpush1.bf16.msra.mxu0 %v337
      %929 = vmatprep.subr.bf16.mxu0 0
      %930 = vmatpush1.bf16.msra.mxu0 %v338
      %931 = vmatprep.subr.bf16.mxu0 0
      %932 = vmatpush1.bf16.msra.mxu0 %v339
      %933 = vmatprep.subr.bf16.mxu0 0
      %934 = vmatpush1.bf16.msra.mxu0 %v340
      %935 = vmatprep.subr.bf16.mxu0 0
      %936 = vmatpush1.bf16.msra.mxu0 %v341
      %937 = vmatprep.subr.bf16.mxu0 0
      %938 = vmatpush1.bf16.msra.mxu0 %v342
      %939 = vmatprep.subr.bf16.mxu0 0
      %940 = vmatpush1.bf16.msra.mxu0 %v343
      %941 = vmatprep.mubr.bf16.mxu0 %v733
      %942 = vmatmul.mubr.bf16.gmra.mrb[0].mxu0 %v732
      %v943 = vpop.f32.mrb[0].mxu0
      %v944 = vadd.f32 %v904, %v943
      %v945 = vpop.f32.mrb[0].mxu0
      %v946 = vpop.f32.mrb[0].mxu0
      %v947 = vpop.f32.mrb[0].mxu0
      %948 = vdwg.mxu0
      %949 = vmatprep.subr.bf16.mxu0 0
      %950 = vmatpush1.bf16.msra.mxu0 %v344
      %951 = vmatprep.subr.bf16.mxu0 0
      %952 = vmatpush1.bf16.msra.mxu0 %v345
      %953 = vmatprep.subr.bf16.mxu0 0
      %954 = vmatpush1.bf16.msra.mxu0 %v346
      %955 = vmatprep.subr.bf16.mxu0 0
      %956 = vmatpush1.bf16.msra.mxu0 %v347
      %957 = vmatprep.subr.bf16.mxu0 0
      %958 = vmatpush1.bf16.msra.mxu0 %v348
      %959 = vmatprep.subr.bf16.mxu0 0
      %960 = vmatpush1.bf16.msra.mxu0 %v349
      %961 = vmatprep.subr.bf16.mxu0 0
      %962 = vmatpush1.bf16.msra.mxu0 %v350
      %963 = vmatprep.subr.bf16.mxu0 0
      %964 = vmatpush1.bf16.msra.mxu0 %v351
      %965 = vmatprep.subr.bf16.mxu0 0
      %966 = vmatpush1.bf16.msra.mxu0 0
      %967 = vmatprep.subr.bf16.mxu0 0
      %968 = vmatpush1.bf16.msra.mxu0 0
      %969 = vmatprep.subr.bf16.mxu0 0
      %970 = vmatpush1.bf16.msra.mxu0 0
      %971 = vmatprep.subr.bf16.mxu0 0
      %972 = vmatpush1.bf16.msra.mxu0 0
      %973 = vmatprep.subr.bf16.mxu0 0
      %974 = vmatpush1.bf16.msra.mxu0 0
      %975 = vmatprep.subr.bf16.mxu0 0
      %976 = vmatpush1.bf16.msra.mxu0 0
      %977 = vmatprep.subr.bf16.mxu0 0
      %978 = vmatpush1.bf16.msra.mxu0 0
      %979 = vmatprep.subr.bf16.mxu0 0
      %980 = vmatpush1.bf16.msra.mxu0 0
      %981 = vmatprep.mubr.bf16.mxu0 0
      %982 = vmatmul.mubr.bf16.gmra.mrb[0].mxu0 %v734
      %v983 = vpop.f32.mrb[0].mxu0
      %v984 = vadd.f32 %v944, %v983
      %v985 = vpop.f32.mrb[0].mxu0
      %v986 = vpop.f32.mrb[0].mxu0
      %v987 = vpop.f32.mrb[0].mxu0
      %988 = vdwg.mxu0
      %v989 = vrsqrt.pop %v984
      %v990 = vmul.f32 %v984, %v989
      %vm991 = vcmp.eq.f32.partialorder %v984, inf
      %v992 = vsel %vm991, %v984, %v990
      %vm993 = vcmp.eq.f32.partialorder %v984, 0.0
      %v994 = vand.u32 %v984, 2147483648
      %v995 = vsel %vm993, %v994, %v992
      %s996 = smul.u32 0, 8
      %v997 = vlaneseq
      %v998 = vshrl.u32 %v997, 7
      %v999 = vstv %s996
      %v1000 = vadd.s32 %v999, %v998
      %vm1001 = vcmp.lt.s32.totalorder %v1000, 2
      %v1002 = vsel %vm1001, %v995, -inf
      %v1003 = vsel %vm1001, %v995, inf
      %v1004 = vsel %vm1001, %v995, 0.0
      %v1005 = vld [vmem:[#allocation3] sm:$0xff]
      %v1006 = vmax.f32 %v1005, %v1002
      %1007 = vst [vmem:[#allocation3] sm:$0xff] %v1006
      %v1008 = vld [vmem:[#allocation4] sm:$0xff]
      %v1009 = vmin.f32 %v1008, %v1003
      %1010 = vst [vmem:[#allocation4] sm:$0xff] %v1009
      %v1011 = vld [vmem:[#allocation5] sm:$0xff]
      %v1012 = vadd.f32 %v1011, %v1004
      %1013 = vst [vmem:[#allocation5] sm:$0xff] %v1012
      %v1014 = vld [vmem:[#allocation3] sm:$0xff]
      %v1015 = vrot.slane %v1014, 4
      %v1016 = vmax.f32 %v1014, %v1015
      %v1017 = vrot.slane %v1016, 2
      %v1018 = vmax.f32 %v1016, %v1017
      %v1019 = vrot.slane %v1018, 1
      %v1020 = vmax.f32 %v1018, %v1019
      %1021 = vst [vmem:[#allocation9] sm:$0xff] %v1020
      %v1022 = vld [vmem:[#allocation4] sm:$0xff]
      %v1023 = vrot.slane %v1022, 4
      %v1024 = vmin.f32 %v1022, %v1023
      %v1025 = vrot.slane %v1024, 2
      %v1026 = vmin.f32 %v1024, %v1025
      %v1027 = vrot.slane %v1026, 1
      %v1028 = vmin.f32 %v1026, %v1027
      %1029 = vst [vmem:[#allocation10] sm:$0xff] %v1028
      %v1030 = vld [vmem:[#allocation5] sm:$0xff]
      %v1031 = vrot.slane %v1030, 4
      %v1032 = vadd.f32 %v1030, %v1031
      %v1033 = vrot.slane %v1032, 2
      %v1034 = vadd.f32 %v1032, %v1033
      %v1035 = vrot.slane %v1034, 1
      %v1036 = vadd.f32 %v1034, %v1035
      %1037 = vst [vmem:[#allocation12] sm:$0xff] %v1036
    $region21: #{tpu_custom_call.1} parent=1 // pred_fallthru
      _
    // Predicated region
    $region22: #{tpu_custom_call.1} parent=1 // pred_check
      _
    $region23: #{tpu_custom_call.1} parent=1 // pred_check_branch
      %1039 = sbr.rel (0) target = $region25
    $region24: #{tpu_custom_call.1} parent=1 // pred_region
      %s1041 = ssub.s32 128, 128
      %1042 = vsyncadd [#allocation8], %s1041
      %s1044 = sshll.u32 [#allocation9], 4
      %s1045 = int_to_ptr.vmem [resolvable:$true] %s1044
      %1047 = dma.vmem_to_hbm [thread:$0]  %s1045, 128, %s1, [#allocation8]
    $region25: #{tpu_custom_call.1} parent=1 // pred_fallthru
      _
    // Predicated region
    $region26: #{tpu_custom_call.1} parent=1 // pred_check
      _
    $region27: #{tpu_custom_call.1} parent=1 // pred_check_branch
      %1049 = sbr.rel (0) target = $region29
    $region28: #{tpu_custom_call.1} parent=1 // pred_region
      %s1051 = ssub.s32 128, 128
      %1052 = vsyncadd [#allocation11], %s1051
      %s1054 = sshll.u32 [#allocation10], 4
      %s1055 = int_to_ptr.vmem [resolvable:$true] %s1054
      %1057 = dma.vmem_to_hbm [thread:$0]  %s1055, 128, %s2, [#allocation11]
    $region29: #{tpu_custom_call.1} parent=1 // pred_fallthru
      _
    // Predicated region
    $region30: #{tpu_custom_call.1} parent=1 // pred_check
      _
    $region31: #{tpu_custom_call.1} parent=1 // pred_check_branch
      %1059 = sbr.rel (0) target = $region33
    $region32: #{tpu_custom_call.1} parent=1 // pred_region
      %s1061 = ssub.s32 128, 128
      %1062 = vsyncadd [#allocation11], %s1061
      %s1064 = sshll.u32 [#allocation12], 4
      %s1065 = int_to_ptr.vmem [resolvable:$true] %s1064
      %1067 = dma.vmem_to_hbm [thread:$0]  %s1065, 128, %s3, [#allocation11]
    $region33: #{tpu_custom_call.1} parent=1 // pred_fallthru
      _
    // Predicated region
    $region34: #{tpu_custom_call.1} parent=1 // pred_check
      _
    $region35: #{tpu_custom_call.1} parent=1 // pred_check_branch
      %1069 = sbr.rel (0) target = $region37
    $region36: #{tpu_custom_call.1} parent=1 // pred_region
      %1070 = dma.done [#allocation8], 128
    $region37: #{tpu_custom_call.1} parent=1 // pred_fallthru
      _
    // Predicated region
    $region38: #{tpu_custom_call.1} parent=1 // pred_check
      _
    $region39: #{tpu_custom_call.1} parent=1 // pred_check_branch
      %1072 = sbr.rel (0) target = $region41
    $region40: #{tpu_custom_call.1} parent=1 // pred_region
      %1073 = dma.done [#allocation11], 128
    $region41: #{tpu_custom_call.1} parent=1 // pred_fallthru
      _
    // Predicated region
    $region42: #{tpu_custom_call.1} parent=1 // pred_check
      _
    $region43: #{tpu_custom_call.1} parent=1 // pred_check_branch
      %1075 = sbr.rel (0) target = $region45
    $region44: #{tpu_custom_call.1} parent=1 // pred_region
      %1076 = dma.done [#allocation11], 128
    $region45: #{tpu_custom_call.1} parent=1 // pred_fallthru
      _
    %1077 = vsyncpa [#allocation7], 1
    %1078 = vsyncpa [#allocation8], 1
    %1079 = vsyncpa [#allocation11], 1

</llo_original>
